<compile_context>
chip_gen: v7x
topology: tpu7x:2x2x1
jax: 0.10.0
libtpu: 0.0.40
codegen_flags: <defaults>
</compile_context>

<pallas_src>
import functools

import jax
import jax.numpy as jnp
from jax.experimental import pallas as pl
from jax.experimental.pallas import tpu as pltpu

_SUB, _LANE = 8, 128   # f32 vreg tile (sublanes x lanes)
_PAD_POS = 1e30        # -logsigmoid(_PAD_POS) == 0 exactly -> padded p elements add 0


def _sigmoid_loss_kernel(p_ref, n_ref, out_ref, *, adv_temperature, batch,
                         block_rows, ragged, p_masked, compute_dtype,
                         approx_recip):
    # bf16 inputs -> bf16 elementwise/EUP math (2x EUP throughput on v6e/v7x,
    # merely not-faster on v5e); accumulation stays f32.
    p = p_ref[...].astype(compute_dtype)
    n = n_ref[...].astype(compute_dtype)

    if adv_temperature:
        # weights = softmax(adv_temperature * n, axis=-1); n = weights * n
        logits = adv_temperature * n
        m = jnp.max(logits, axis=-1, keepdims=True)
        e = jnp.exp(logits - m)
        # f32 row-sum + one per-row reciprocal instead of a per-element divide.
        s = jnp.sum(e.astype(jnp.float32), axis=-1, keepdims=True)
        inv = pl.reciprocal(s, approx=approx_recip).astype(compute_dtype)
        n = (e * inv) * n

    # -logsigmoid(x) = softplus(-x) = max(-x, 0) + log1p(exp(-|x|))
    p_nls = jnp.maximum(-p, 0) + jnp.log1p(jnp.exp(-jnp.abs(p)))
    n_nls = jnp.maximum(n, 0) + jnp.log1p(jnp.exp(-jnp.abs(n)))

    p_vals = p_nls.astype(jnp.float32)
    n_vals = n_nls.astype(jnp.float32)

    if ragged:
        # Only traced when batch % block_rows != 0, so the common divisible case
        # pays no iota/compare/select on the VPU.
        i = pl.program_id(0)
        row = jax.lax.broadcasted_iota(jnp.int32, (block_rows, 1), 0) + i * block_rows
        valid = row < batch
        n_vals = jnp.where(valid, n_vals, 0.0)
        if p_masked:
            p_vals = jnp.where(valid, p_vals, 0.0)

    p_partial = jnp.sum(p_vals)
    n_partial = jnp.sum(n_vals)

    # Single merged lane-dense partial-sum block: rows [0,8) = p, rows [8,16) = n.
    rows = jax.lax.broadcasted_iota(jnp.int32, (1, 2 * _SUB, _LANE), 1)
    out_ref[...] = jnp.where(rows < _SUB, p_partial, n_partial)


def _default_block_rows(batch, num_pos, num_neg, itemsize):
    # Per batch-row VMEM per grid step: double-buffered inputs (x2) plus ~4
    # tile-sized f32 elementwise temporaries (logits / e / nls / selects) -- real
    # usage is ~3-5x the raw input block, budgeted to stay well inside v5e's
    # 16 MiB scoped-VMEM default (and v7x's 64 MiB physical VMEM).
    per_row = (num_pos + num_neg) * (2 * itemsize + 4 * 4)
    budget = 8 * 1024 * 1024
    tb = budget // max(per_row, 1)
    tb = int(min(max(tb, 8), 512))   # ~512 rows already reaches ~85% of HBM roofline
    if batch <= tb:
        return batch
    return max(8, (tb // 8) * 8)


def sigmoid_loss(p_scores, n_scores, adv_temperature=None, block_rows=None):
    """Pallas TPU implementation of SigmoidLoss.forward.

    p_scores: (B, Np), n_scores: (B, Nn).
    Returns (loss, p_loss, n_loss) as 0-d float32 arrays.
    """
    p_scores = jnp.asarray(p_scores)
    n_scores = jnp.asarray(n_scores)
    batch, num_pos = p_scores.shape
    batch_n, num_neg = n_scores.shape
    if batch != batch_n:
        raise ValueError("p_scores and n_scores must share the batch dimension")

    p_itemsize = jnp.dtype(p_scores.dtype).itemsize
    n_itemsize = jnp.dtype(n_scores.dtype).itemsize
    itemsize = max(p_itemsize, n_itemsize)

    use_bf16 = (p_scores.dtype == jnp.bfloat16 and n_scores.dtype == jnp.bfloat16)
    compute_dtype = jnp.bfloat16 if use_bf16 else jnp.float32

    align = 16 if min(p_itemsize, n_itemsize) <= 2 else 8
    if block_rows is None:
        block_rows = _default_block_rows(batch, num_pos, num_neg, itemsize)
    block_rows = int(block_rows)
    if block_rows >= batch:
        block_rows = batch                         # full-array block is always legal
    else:
        block_rows = max(align, (block_rows // align) * align)

    grid_b = -(-batch // block_rows)
    ragged = (batch % block_rows) != 0

    # Lane-density fix for tiny num_pos (common KGE case num_pos == 1): repack p
    # into a lane-dense (rows, 128) slab. Padding uses a large positive score so
    # padded elements contribute exactly 0 to the softplus sum (no mask needed).
    p_dense = num_pos < _LANE
    if p_dense:
        total_p = batch * num_pos
        rows_needed = -(-total_p // _LANE)
        p_align = 16 if p_itemsize <= 2 else 8
        p_rows_blk = -(-rows_needed // grid_b)
        p_rows_blk = max(p_align, -(-p_rows_blk // p_align) * p_align)
        slab_rows = grid_b * p_rows_blk
        pad = slab_rows * _LANE - total_p
        p_in = jnp.pad(p_scores.reshape(-1), (0, pad),
                       constant_values=_PAD_POS).reshape(slab_rows, _LANE)
        p_spec = pl.BlockSpec((p_rows_blk, _LANE), lambda i: (i, 0))
        p_elems_blk = p_rows_blk * _LANE
    else:
        p_in = p_scores
        p_spec = pl.BlockSpec((block_rows, num_pos), lambda i: (i, 0))
        p_elems_blk = block_rows * num_pos

    n_elems_blk = block_rows * num_neg

    # Explicit VMEM accounting: double-buffered inputs + ~4 tile-sized f32 temps.
    est = (2 * (p_elems_blk * p_itemsize + n_elems_blk * n_itemsize)
           + 4 * 4 * (p_elems_blk + n_elems_blk)
           + 2 * 2 * _SUB * _LANE * 4)
    vmem_limit = int(min(max(2 * est, 24 * 1024 * 1024), 48 * 1024 * 1024))

    trans = 2 * batch * (num_pos + num_neg)
    flops = 6 * batch * (num_pos + num_neg)
    if adv_temperature:
        trans += batch * num_neg
        flops += 4 * batch * num_neg
    cost = pl.CostEstimate(
        flops=int(flops),
        transcendentals=int(trans),
        bytes_accessed=int(batch * num_pos * p_itemsize
                           + batch * num_neg * n_itemsize
                           + grid_b * 2 * _SUB * _LANE * 4),
    )

    kernel = functools.partial(
        _sigmoid_loss_kernel,
        adv_temperature=adv_temperature,
        batch=batch,
        block_rows=block_rows,
        ragged=ragged,
        p_masked=not p_dense,
        compute_dtype=compute_dtype,
        approx_recip=use_bf16,
    )

    # TODO(synk): for very wide num_neg (many thousands) add an inner "arbitrary"
    # grid axis / fori_loop chunking over columns so block_rows can stay >= 256.
    part = pl.pallas_call(
        kernel,
        out_shape=jax.ShapeDtypeStruct((grid_b, 2 * _SUB, _LANE), jnp.float32),
        grid=(grid_b,),
        in_specs=[p_spec,
                  pl.BlockSpec((block_rows, num_neg), lambda i: (i, 0))],
        out_specs=pl.BlockSpec((1, 2 * _SUB, _LANE), lambda i: (i, 0, 0)),
        compiler_params=pltpu.CompilerParams(
            # TODO(synk): on v7x, verify both TensorCores are engaged; if not,
            # switch this axis to pltpu.CORE_PARALLEL / pl.core_map.
            dimension_semantics=("parallel",),
            vmem_limit_bytes=vmem_limit,
        ),
        cost_estimate=cost,
    )(p_in, n_scores)

    # Tiny final reduction + normalization in the wrapper.
    p_loss = jnp.sum(part[:, 0, 0]) / (batch * num_pos)
    n_loss = jnp.sum(part[:, _SUB, 0]) / (batch * num_neg)
    loss = (p_loss + n_loss) * 0.5
    # TODO(synk): forward-only; training would need a custom_vjp that detaches the
    # adversarial softmax weights like the PyTorch module does.
    return loss, p_loss, n_loss


def _reference(p_scores, n_scores, adv_temperature=None):
    p = jnp.asarray(p_scores, jnp.float32)
    n = jnp.asarray(n_scores, jnp.float32)
    if adv_temperature:
        w = jax.nn.softmax(adv_temperature * n, axis=-1)
        n = w * n
    p_loss = -jnp.mean(jax.nn.log_sigmoid(p))
    n_loss = -jnp.mean(jax.nn.log_sigmoid(-n))
    return (p_loss + n_loss) / 2.0, p_loss, n_loss


if __name__ == "__main__":
    key = jax.random.PRNGKey(0)
    kp, kn = jax.random.split(key)
    ok = True

    def _check(out, ref, rtol, atol):
        good = True
        for a, b in zip(out, ref):
            if not jnp.allclose(a, b, rtol=rtol, atol=atol):
                good = False
        return good

    # 1) Small f32 shapes, adv on/off, single tile.
    b1, np1, nn1 = 8, 128, 128
    p1 = jax.random.normal(kp, (b1, np1), dtype=jnp.float32) * 3.0
    n1 = jax.random.normal(kn, (b1, nn1), dtype=jnp.float32) * 3.0
    for adv_t in (None, 2.0):
        out = jax.block_until_ready(sigmoid_loss(p1, n1, adv_temperature=adv_t))
        ok &= _check(out, _reference(p1, n1, adv_t), 1e-4, 1e-5)

    # 2) Multi-tile pipelined path with a ragged tail (300 = 2*128 + 44) and a
    #    lane-sparse p (num_pos=64 -> dense repack path), f32.
    b2, np2, nn2 = 300, 64, 256
    p2 = jax.random.normal(kp, (b2, np2), dtype=jnp.float32) * 2.0
    n2 = jax.random.normal(kn, (b2, nn2), dtype=jnp.float32) * 2.0
    out2 = jax.block_until_ready(
        sigmoid_loss(p2, n2, adv_temperature=1.5, block_rows=128))
    ok &= _check(out2, _reference(p2, n2, 1.5), 1e-4, 1e-5)

    # 3) bf16 inputs -> bf16 EUP/VPU path (f32 accumulation), num_pos = 1.
    b3, np3, nn3 = 64, 1, 256
    p3 = (jax.random.normal(kp, (b3, np3), dtype=jnp.float32) * 2.0).astype(jnp.bfloat16)
    n3 = (jax.random.normal(kn, (b3, nn3), dtype=jnp.float32) * 2.0).astype(jnp.bfloat16)
    out3 = jax.block_until_ready(sigmoid_loss(p3, n3, adv_temperature=1.0))
    ok &= _check(out3, _reference(p3, n3, 1.0), 3e-2, 3e-2)

    if ok:
        print("KERNEL_OK")
</pallas_src>

<mosaic_0001>
module attributes {stable_mosaic.version = 11 : i64} {
  func.func @_sigmoid_loss_kernel(%arg0: i32, %arg1: memref<8x128xf32, #tpu.memory_space<vmem>>, %arg2: memref<8x128xf32, #tpu.memory_space<vmem>>, %arg3: memref<1x16x128xf32, #tpu.memory_space<vmem>>) attributes {dimension_semantics = [#tpu.dimension_semantics<parallel>], iteration_bounds = array<i64: 1>, scalar_prefetch = 0 : i64, scratch_operands = 0 : i64, tpu.core_type = #tpu.core_type<tc>, window_params = [{transform_indices = @transform_0, window_bounds = array<i64: 8, 128>}, {transform_indices = @transform_1, window_bounds = array<i64: 8, 128>}, {transform_indices = @transform_2, window_bounds = array<i64: 1, 16, 128>}]} {
    %c0 = arith.constant 0 : index
    %c0_0 = arith.constant 0 : index
    %0 = vector.load %arg1[%c0, %c0_0] : memref<8x128xf32, #tpu.memory_space<vmem>>, vector<8x128xf32>
    %c0_1 = arith.constant 0 : index
    %c0_2 = arith.constant 0 : index
    %1 = vector.load %arg2[%c0_1, %c0_2] : memref<8x128xf32, #tpu.memory_space<vmem>>, vector<8x128xf32>
    %cst = arith.constant 0.000000e+00 : f32
    %2 = vector.broadcast %cst : f32 to vector<8x128xf32>
    %3 = arith.subf %2, %0 : vector<8x128xf32>
    %cst_3 = arith.constant 0.000000e+00 : f32
    %4 = vector.broadcast %cst_3 : f32 to vector<8x128xf32>
    %5 = arith.maximumf %3, %4 : vector<8x128xf32>
    %6 = math.absf %0 : vector<8x128xf32>
    %cst_4 = arith.constant 0.000000e+00 : f32
    %7 = vector.broadcast %cst_4 : f32 to vector<8x128xf32>
    %8 = arith.subf %7, %6 : vector<8x128xf32>
    %9 = math.exp %8 : vector<8x128xf32>
    %10 = math.log1p %9 : vector<8x128xf32>
    %11 = arith.addf %5, %10 : vector<8x128xf32>
    %cst_5 = arith.constant 0.000000e+00 : f32
    %12 = vector.broadcast %cst_5 : f32 to vector<8x128xf32>
    %13 = arith.maximumf %1, %12 : vector<8x128xf32>
    %14 = math.absf %1 : vector<8x128xf32>
    %cst_6 = arith.constant 0.000000e+00 : f32
    %15 = vector.broadcast %cst_6 : f32 to vector<8x128xf32>
    %16 = arith.subf %15, %14 : vector<8x128xf32>
    %17 = math.exp %16 : vector<8x128xf32>
    %18 = math.log1p %17 : vector<8x128xf32>
    %19 = arith.addf %13, %18 : vector<8x128xf32>
    %20 = vector.shape_cast %11 : vector<8x128xf32> to vector<1x8x128xf32>
    %cst_7 = arith.constant dense<0.000000e+00> : vector<1xf32>
    %21 = vector.multi_reduction <add>, %20, %cst_7 [1, 2] : vector<1x8x128xf32> to vector<1xf32>
    %22 = vector.shape_cast %21 : vector<1xf32> to vector<1x1x1xf32>
    %23 = vector.extract %22[0, 0, 0] : f32 from vector<1x1x1xf32>
    %24 = vector.shape_cast %19 : vector<8x128xf32> to vector<1x8x128xf32>
    %cst_8 = arith.constant dense<0.000000e+00> : vector<1xf32>
    %25 = vector.multi_reduction <add>, %24, %cst_8 [1, 2] : vector<1x8x128xf32> to vector<1xf32>
    %26 = vector.shape_cast %25 : vector<1xf32> to vector<1x1x1xf32>
    %27 = vector.extract %26[0, 0, 0] : f32 from vector<1x1x1xf32>
    %28 = tpu.iota {dimensions = array<i32: 1>} : vector<1x16x128xi32>
    %c8_i32 = arith.constant 8 : i32
    %29 = vector.broadcast %c8_i32 : i32 to vector<1x16x128xi32>
    %30 = arith.cmpi slt, %28, %29 : vector<1x16x128xi32>
    %31 = vector.broadcast %23 : f32 to vector<1x16x128xf32>
    %32 = vector.broadcast %27 : f32 to vector<1x16x128xf32>
    %33 = arith.select %30, %31, %32 : vector<1x16x128xi1>, vector<1x16x128xf32>
    %c0_9 = arith.constant 0 : index
    %c0_10 = arith.constant 0 : index
    %c0_11 = arith.constant 0 : index
    %34 = vector.load %arg3[%c0_9, %c0_10, %c0_11] : memref<1x16x128xf32, #tpu.memory_space<vmem>>, vector<1x16x128xf32>
    tpu.vector_store %arg3[%c0_9, %c0_10, %c0_11], %33 {strides = array<i32>} : memref<1x16x128xf32, #tpu.memory_space<vmem>>, vector<1x16x128xf32>,
    return
  }
  func.func @transform_0(%arg0: i32) -> (i32, i32) {
    %c0_i32 = arith.constant 0 : i32
    %c0_i32_0 = arith.constant 0 : i32
    return %arg0, %c0_i32 : i32, i32
  }
  func.func @transform_1(%arg0: i32) -> (i32, i32) {
    %c0_i32 = arith.constant 0 : i32
    %c0_i32_0 = arith.constant 0 : i32
    return %arg0, %c0_i32 : i32, i32
  }
  func.func @transform_2(%arg0: i32) -> (i32, i32, i32) {
    %c0_i32 = arith.constant 0 : i32
    %c0_i32_0 = arith.constant 0 : i32
    %c0_i32_1 = arith.constant 0 : i32
    return %arg0, %c0_i32, %c0_i32_0 : i32, i32, i32
  }
}

</mosaic_0001>

<llo_original>
// kernel: tpu_custom_call.1
$region0: #{tpu_custom_call.1}
  #allocation0 [shape = 'u32[]', space=smem, size = 0x4, offset = 0x4, fixed_abs, tag = 'smem constant byte address 0x4 - core index']
  #allocation1 [shape = 'u32[144,128]{1,0:T(1,128)}', space=vmem, size = 0x12000, scoped, tag = 'internal scratch']
  %s0 = inlined_call_operand.hbm [shape: f32[8,128], index: 0, kind: input, shape index: {}]
  %s1 = inlined_call_operand.hbm [shape: f32[8,128], index: 1, kind: input, shape index: {}]
  %s2 = inlined_call_operand.hbm [shape: f32[1,16,128], index: 2, kind: output, shape index: {}]
  %s3 = sld [smem:[#allocation0]]
  $region26: #{tpu_custom_call.1} parent=0
    _
  %s5 = ssub.s32 1, %s3
  %s6 = scalar_select 0, %s5, %s3
  $region1: #{tpu_custom_call.1} parent=0
    #allocation2 [shape = 'u8[4096]{0}', space=vmem, size = 0x1000, scoped, tag = 'input window, operand 0, single buffered']
    #allocation3 [shape = 's32[1]{0}', space=sflag, size = 0x4, scoped, tag = 'scoped memory for tpu_custom_call.1']
    #allocation4 [shape = 's32[1]{0}', space=sflag, size = 0x4, scoped, tag = 'scoped memory for tpu_custom_call.1']
    #allocation5 [shape = 'u8[4096]{0}', space=vmem, size = 0x1000, scoped, tag = 'input window, operand 1, single buffered']
    #allocation6 [shape = 's32[1]{0}', space=sflag, size = 0x4, scoped, tag = 'scoped memory for tpu_custom_call.1']
    #allocation7 [shape = 'u8[8192]{0}', space=vmem, size = 0x2000, scoped, tag = 'output window, operand 0, single buffered']
    %7 = vsyncpa [#allocation3], 0
    %8 = vsyncpa [#allocation6], 0
    %9 = vsyncpa [#allocation4], 0
    // Predicated region
    $region2: #{tpu_custom_call.1} parent=1 // pred_check
      _
    $region3: #{tpu_custom_call.1} parent=1 // pred_check_branch
      %11 = sbr.rel (0) target = $region5
    $region4: #{tpu_custom_call.1} parent=1 // pred_region
      %s13 = ssub.s32 128, 128
      %14 = vsyncadd [#allocation3], %s13
      %s16 = sshll.u32 [#allocation2], 4
      %s17 = int_to_ptr.vmem [resolvable:$true] %s16
      %19 = dma.hbm_to_vmem [thread:$0]  %s0, 128, %s17, [#allocation3]
    $region5: #{tpu_custom_call.1} parent=1 // pred_fallthru
      _
    // Predicated region
    $region6: #{tpu_custom_call.1} parent=1 // pred_check
      _
    $region7: #{tpu_custom_call.1} parent=1 // pred_check_branch
      %21 = sbr.rel (0) target = $region9
    $region8: #{tpu_custom_call.1} parent=1 // pred_region
      %s23 = ssub.s32 128, 128
      %24 = vsyncadd [#allocation6], %s23
      %s26 = sshll.u32 [#allocation5], 4
      %s27 = int_to_ptr.vmem [resolvable:$true] %s26
      %29 = dma.hbm_to_vmem [thread:$0]  %s1, 128, %s27, [#allocation6]
    $region9: #{tpu_custom_call.1} parent=1 // pred_fallthru
      _
    // Predicated region
    $region10: #{tpu_custom_call.1} parent=1 // pred_check
      _
    $region11: #{tpu_custom_call.1} parent=1 // pred_check_branch
      %31 = sbr.rel (0) target = $region13
    $region12: #{tpu_custom_call.1} parent=1 // pred_region
      %32 = dma.done [#allocation3], 128
    $region13: #{tpu_custom_call.1} parent=1 // pred_fallthru
      _
    // Predicated region
    $region14: #{tpu_custom_call.1} parent=1 // pred_check
      _
    $region15: #{tpu_custom_call.1} parent=1 // pred_check_branch
      %34 = sbr.rel (0) target = $region17
    $region16: #{tpu_custom_call.1} parent=1 // pred_region
      %35 = dma.done [#allocation6], 128
    $region17: #{tpu_custom_call.1} parent=1 // pred_fallthru
      _
    %v36 = vld [vmem:[#allocation2] sm:$0xff]
    %v37 = vld [vmem:[#allocation5] sm:$0xff]
    %v38 = vsub.f32 0.0, %v36
    %v39 = vmax.f32 %v38, 0.0
    %v40 = vand.u32 2147483647, %v36
    %v41 = vsub.f32 0.0, %v40
    %v42 = vmul.f32 %v41, 1.442695
    %v43 = vpow.pop %v42
    %v44 = vadd.f32 %v43, 1.0
    %v45 = vlog2.pop %v44
    %v46 = vmul.f32 %v45, 0.6931472
    %v47 = vmul.f32 -0.5, %v43
    %v48 = vadd.f32 %v47, 1.0
    %v49 = vmul.f32 %v48, %v43
    %v50 = vand.u32 2147483647, %v43
    %vm51 = vcmp.lt.f32.partialorder %v50, 0.0004427343
    %v52 = vsel %vm51, %v49, %v46
    %v53 = vadd.f32 %v39, %v52
    %v54 = vmax.f32 %v37, 0.0
    %v55 = vand.u32 2147483647, %v37
    %v56 = vsub.f32 0.0, %v55
    %v57 = vmul.f32 %v56, 1.442695
    %v58 = vpow.pop %v57
    %v59 = vadd.f32 %v58, 1.0
    %v60 = vlog2.pop %v59
    %v61 = vmul.f32 %v60, 0.6931472
    %v62 = vmul.f32 -0.5, %v58
    %v63 = vadd.f32 %v62, 1.0
    %v64 = vmul.f32 %v63, %v58
    %v65 = vand.u32 2147483647, %v58
    %vm66 = vcmp.lt.f32.partialorder %v65, 0.0004427343
    %v67 = vsel %vm66, %v64, %v61
    %v68 = vadd.f32 %v54, %v67
    %69 = vadd.xlane.f32.xlu0 %v53
    %v70 = vpop.xlane.xlu0 %69
    %v71 = vrot.slane %v70, 4
    %v72 = vadd.f32 %v70, %v71
    %v73 = vrot.slane %v72, 2
    %v74 = vadd.f32 %v72, %v73
    %v75 = vrot.slane %v74, 1
    %v76 = vadd.f32 %v74, %v75
    %s77 = vtos %v76
    %78 = vadd.xlane.f32.xlu0 %v68
    %v79 = vpop.xlane.xlu0 %78
    %v80 = vrot.slane %v79, 4
    %v81 = vadd.f32 %v79, %v80
    %v82 = vrot.slane %v81, 2
    %v83 = vadd.f32 %v81, %v82
    %v84 = vrot.slane %v83, 1
    %v85 = vadd.f32 %v83, %v84
    %s86 = vtos %v85
    %v87 = vlaneseq
    %v88 = vshrl.u32 %v87, 7
    %v89 = vadd.s32 %v88, 8
    %vm90 = vcmp.lt.s32.totalorder %v88, 8
    %vm91 = vcmp.lt.s32.totalorder %v89, 8
    %v92 = vstv %s77
    %v93 = vstv %s86
    %v94 = vsel %vm90, %v92, %v93
    %v95 = vsel %vm91, %v92, %v93
    %96 = vst [vmem:[#allocation7] sm:$0xff] %v94
    %97 = vst [vmem:[#allocation7 + $0x8] sm:$0xff] %v95
    // Predicated region
    $region18: #{tpu_custom_call.1} parent=1 // pred_check
      _
    $region19: #{tpu_custom_call.1} parent=1 // pred_check_branch
      %99 = sbr.rel (0) target = $region21
    $region20: #{tpu_custom_call.1} parent=1 // pred_region
      %s101 = ssub.s32 256, 256
      %102 = vsyncadd [#allocation4], %s101
      %s103 = sshll.u32 [#allocation7], 4
      %s104 = int_to_ptr.vmem [resolvable:$true] %s103
      %109 = dma.vmem_to_hbm [thread:$0]  %s104, 256, %s2, [#allocation4], 128, 128, 8
    $region21: #{tpu_custom_call.1} parent=1 // pred_fallthru
      _
    // Predicated region
    $region22: #{tpu_custom_call.1} parent=1 // pred_check
      _
    $region23: #{tpu_custom_call.1} parent=1 // pred_check_branch
      %111 = sbr.rel (0) target = $region25
    $region24: #{tpu_custom_call.1} parent=1 // pred_region
      %112 = dma.done [#allocation4], 256
    $region25: #{tpu_custom_call.1} parent=1 // pred_fallthru
      _
    %113 = vsyncpa [#allocation3], 1
    %114 = vsyncpa [#allocation6], 1
    %115 = vsyncpa [#allocation4], 1

</llo_original>
